<compile_context>
chip_gen: v6e
topology: v6e:2x2x1
jax: 0.10.0
libtpu: 0.0.40
codegen_flags: <defaults>
</compile_context>

<pallas_src>
import functools
import math

import jax
import jax.numpy as jnp
import numpy as np
from jax.experimental import pallas as pl
from jax.experimental.pallas import tpu as pltpu

_LANE = 128
_SUB = 8


def _warmup_loss_kernel(ylik_ref, zlik_ref, xhat_ref, tgt_ref, y_ref, pred_ref,
                        out_ref,
                        acc_y, acc_z, acc_mse, acc_pred,
                        *, lmbda, alpha, num_pixels, n_xhat):
    step = pl.program_id(1)                     # reduction axis ("arbitrary")
    last = pl.num_programs(1) - 1

    @pl.when(step == 0)
    def _init():
        acc_y[...] = jnp.zeros_like(acc_y)
        acc_z[...] = jnp.zeros_like(acc_z)
        acc_mse[...] = jnp.zeros_like(acc_mse)
        acc_pred[...] = jnp.zeros_like(acc_pred)

    def _partial(x):
        # (r, 128) -> (r//8, 8, 128) -> sum over leading dim: pure VPU vreg adds
        # (8-sublane groups align with native (8,128) tiles, so the reshape is
        # layout-free); no cross-lane/XLU work inside the hot loop.
        r, c = x.shape
        return jnp.sum(x.reshape(r // _SUB, _SUB, c), axis=0)

    # EUP (log) work and VPU (diff^2 / abs-diff) work interleave in the same
    # step and overlap the double-buffered DMA of the next tiles.
    acc_y[...] += _partial(jnp.log(ylik_ref[...]))
    acc_z[...] += _partial(jnp.log(zlik_ref[...]))
    d = xhat_ref[...] - tgt_ref[...]
    acc_mse[...] += _partial(d * d)
    acc_pred[...] += _partial(jnp.abs(y_ref[...] - pred_ref[...]))

    @pl.when(step == last)
    def _finalize():
        inv_bpp = 1.0 / (-math.log(2.0) * num_pixels)

        def _collapse(acc):
            s = jnp.sum(acc[...], axis=0, keepdims=True)   # sublane reduce -> (1, 128)
            return jnp.sum(s, axis=1, keepdims=True)        # lane reduce    -> (1, 1)

        # All outputs are linear in the raw sums, so each split emits its own
        # scaled contribution; the wrapper just adds the split rows.
        y_bpp = _collapse(acc_y) * inv_bpp
        z_bpp = _collapse(acc_z) * inv_bpp
        bpp = y_bpp + z_bpp
        mse = _collapse(acc_mse) * (255.0 ** 2 / n_xhat)
        pred = _collapse(acc_pred) * (1.0 / num_pixels)
        loss = lmbda * mse + bpp + alpha * pred

        # Pack the six scalars into one lane-dense (8, 128) slab (single store).
        lane = jax.lax.broadcasted_iota(jnp.int32, (_SUB, _LANE), 1)
        packed = (jnp.where(lane == 0, bpp, 0.0)
                  + jnp.where(lane == 1, y_bpp, 0.0)
                  + jnp.where(lane == 2, z_bpp, 0.0)
                  + jnp.where(lane == 3, mse, 0.0)
                  + jnp.where(lane == 4, pred, 0.0)
                  + jnp.where(lane == 5, loss, 0.0))
        out_ref[...] = packed[None]              # (1, 8, 128) block for this split


def _flatten_list(x):
    """Flatten a tensor or a list/tuple of tensors into one f32 vector."""
    if isinstance(x, (list, tuple)):
        return jnp.concatenate([jnp.ravel(t).astype(jnp.float32) for t in x])
    return jnp.ravel(x).astype(jnp.float32)


def _as_tiles(flat, fill, num_tiles):
    """Pad a flat f32 vector with a neutral `fill` up to a multiple of
    num_tiles * 8 * 128 elements and reshape lane-dense to (rows, 128)."""
    n = flat.shape[0]
    chunk = num_tiles * _SUB * _LANE
    padded = ((n + chunk - 1) // chunk) * chunk
    if padded != n:
        flat = jnp.pad(flat, (0, padded - n), constant_values=fill)
    return flat.reshape(padded // _LANE, _LANE)


def warmup_loss(output, target, *, lmbda=0.01, alpha=1.0,
                tile_elems=128 * 1024, num_splits=2):
    """Pallas implementation of WarmUpLoss.forward.

    num_splits: size of the leading "parallel" grid axis (2 exploits both
    TensorCores on v7x; on single-core chips it just iterates sequentially).
    """
    N, _, H, W = target.shape
    num_pixels = N * H * W
    f32 = jnp.float32

    ylik = jnp.ravel(output['likelihoods']['y']).astype(f32)
    zlik = jnp.ravel(output['likelihoods']['z']).astype(f32)
    xhat = jnp.ravel(output['x_hat']).astype(f32)
    tgt = jnp.ravel(target).astype(f32)
    yy = _flatten_list(output['y'])
    preds = _flatten_list(output['preds'])
    n_xhat = xhat.shape[0]

    # One shared grid: every input is split into the same number of row tiles
    # (per-input block heights differ). tile_elems ~128K f32 (1024 rows) for
    # the largest input per step => <=6 MiB of double-buffered VMEM for the six
    # inputs, inside the default scoped-VMEM limit on v5e/v6e/v7x.
    max_elems = max(ylik.shape[0], zlik.shape[0], xhat.shape[0],
                    yy.shape[0], preds.shape[0])
    tiles_per_split = max(1, -(-max_elems // (int(tile_elems) * num_splits)))
    total_tiles = num_splits * tiles_per_split

    # Neutral fills keep padded elements out of every sum (log(1)=0, 0-0=0).
    ylik2 = _as_tiles(ylik, 1.0, total_tiles)
    zlik2 = _as_tiles(zlik, 1.0, total_tiles)
    xhat2 = _as_tiles(xhat, 0.0, total_tiles)
    tgt2 = _as_tiles(tgt, 0.0, total_tiles)
    y2 = _as_tiles(yy, 0.0, total_tiles)
    pred2 = _as_tiles(preds, 0.0, total_tiles)

    def _spec(arr):
        rows = arr.shape[0] // total_tiles   # multiple of 8 by construction
        return pl.BlockSpec(
            (rows, _LANE),
            lambda c, i, tps=tiles_per_split: (c * tps + i, 0))

    kernel = functools.partial(
        _warmup_loss_kernel,
        lmbda=float(lmbda), alpha=float(alpha),
        num_pixels=float(num_pixels), n_xhat=float(n_xhat))

    out = pl.pallas_call(
        kernel,
        out_shape=jax.ShapeDtypeStruct((num_splits, _SUB, _LANE), jnp.float32),
        grid_spec=pltpu.PrefetchScalarGridSpec(
            num_scalar_prefetch=0,
            grid=(num_splits, tiles_per_split),
            in_specs=[_spec(ylik2), _spec(zlik2), _spec(xhat2),
                      _spec(tgt2), _spec(y2), _spec(pred2)],
            out_specs=pl.BlockSpec((1, _SUB, _LANE), lambda c, i: (c, 0, 0)),
            scratch_shapes=[pltpu.VMEM((_SUB, _LANE), jnp.float32)] * 4),
        compiler_params=pltpu.CompilerParams(
            dimension_semantics=("parallel", "arbitrary")),
    )(ylik2, zlik2, xhat2, tgt2, y2, pred2)

    # Combine the per-split (per-core) scaled contributions: everything is
    # linear in the raw sums, so a plain add is exact.
    res = jnp.sum(out[:, 0, :], axis=0)
    return {
        'bpp_loss': res[0],
        'y_bpp_loss': res[1],
        'z_bpp_loss': res[2],
        'mse_loss': res[3],
        'pred_loss': res[4],
        'loss': res[5],
    }


def _reference(output, target, lmbda, alpha):
    """Pure-JAX reference matching the PyTorch WarmUpLoss module."""
    N, _, H, W = target.shape
    num_pixels = N * H * W
    ln2 = math.log(2.0)
    y_bpp = jnp.sum(jnp.log(output['likelihoods']['y'])) / (-ln2 * num_pixels)
    z_bpp = jnp.sum(jnp.log(output['likelihoods']['z'])) / (-ln2 * num_pixels)
    bpp = y_bpp + z_bpp
    pred = jnp.float32(0.0)
    for yi, pi in zip(output['y'], output['preds']):
        pred = pred + jnp.sum(jnp.abs(yi - pi)) / num_pixels
    mse = jnp.mean((output['x_hat'] - target) ** 2) * 255.0 ** 2
    loss = lmbda * mse + bpp + alpha * pred
    return {'bpp_loss': bpp, 'y_bpp_loss': y_bpp, 'z_bpp_loss': z_bpp,
            'mse_loss': mse, 'pred_loss': pred, 'loss': loss}


if __name__ == "__main__":
    key = jax.random.PRNGKey(0)
    k1, k2, k3, k4, k5, k6, k7, k8 = jax.random.split(key, 8)

    N, C, H, W = 2, 3, 16, 16        # image
    Cy, Hy, Wy = 4, 8, 8             # latent y
    Cz, Hz, Wz = 4, 4, 4             # latent z
    lmbda, alpha = 0.01, 1.0

    target = jax.random.uniform(k1, (N, C, H, W), jnp.float32)
    x_hat = target + 0.05 * jax.random.normal(k2, (N, C, H, W), jnp.float32)
    y_lik = jax.random.uniform(k3, (N, Cy, Hy, Wy), jnp.float32,
                               minval=0.05, maxval=1.0)
    z_lik = jax.random.uniform(k4, (N, Cz, Hz, Wz), jnp.float32,
                               minval=0.05, maxval=1.0)
    y0 = jax.random.normal(k5, (N, Cy, Hy, Wy), jnp.float32)
    y1 = jax.random.normal(k6, (N, Cy, Hy, Wy), jnp.float32)
    p0 = y0 + 0.1 * jax.random.normal(k7, (N, Cy, Hy, Wy), jnp.float32)
    p1 = y1 + 0.1 * jax.random.normal(k8, (N, Cy, Hy, Wy), jnp.float32)

    output = {'x_hat': x_hat,
              'likelihoods': {'y': y_lik, 'z': z_lik},
              'y': [y0, y1],
              'preds': [p0, p1]}

    # Small tile_elems so the test exercises a multi-step (pipelined) 2x2 grid.
    out = warmup_loss(output, target, lmbda=lmbda, alpha=alpha,
                      tile_elems=512, num_splits=2)
    jax.block_until_ready(out['loss'])

    ref = _reference(output, target, lmbda, alpha)
    for k in ref:
        np.testing.assert_allclose(np.asarray(out[k]), np.asarray(ref[k]),
                                   rtol=1e-3, atol=1e-5)

    print("KERNEL_OK")
</pallas_src>

<mosaic_0001>
module attributes {stable_mosaic.version = 11 : i64} {
  func.func @_warmup_loss_kernel(%arg0: i32, %arg1: i32, %arg2: memref<8x128xf32, #tpu.memory_space<vmem>>, %arg3: memref<8x128xf32, #tpu.memory_space<vmem>>, %arg4: memref<8x128xf32, #tpu.memory_space<vmem>>, %arg5: memref<8x128xf32, #tpu.memory_space<vmem>>, %arg6: memref<8x128xf32, #tpu.memory_space<vmem>>, %arg7: memref<8x128xf32, #tpu.memory_space<vmem>>, %arg8: memref<1x8x128xf32, #tpu.memory_space<vmem>>, %arg9: memref<8x128xf32, #tpu.memory_space<vmem>>, %arg10: memref<8x128xf32, #tpu.memory_space<vmem>>, %arg11: memref<8x128xf32, #tpu.memory_space<vmem>>, %arg12: memref<8x128xf32, #tpu.memory_space<vmem>>) attributes {dimension_semantics = [#tpu.dimension_semantics<parallel>, #tpu.dimension_semantics<arbitrary>], iteration_bounds = array<i64: 2, 2>, scalar_prefetch = 0 : i64, scratch_operands = 4 : i64, tpu.core_type = #tpu.core_type<tc>, window_params = [{transform_indices = @transform_0, window_bounds = array<i64: 8, 128>}, {transform_indices = @transform_1, window_bounds = array<i64: 8, 128>}, {transform_indices = @transform_2, window_bounds = array<i64: 8, 128>}, {transform_indices = @transform_3, window_bounds = array<i64: 8, 128>}, {transform_indices = @transform_4, window_bounds = array<i64: 8, 128>}, {transform_indices = @transform_5, window_bounds = array<i64: 8, 128>}, {transform_indices = @transform_6, window_bounds = array<i64: 1, 8, 128>}]} {
    %c0_i32 = arith.constant 0 : i32
    %0 = arith.cmpi eq, %arg1, %c0_i32 : i32
    %1 = arith.extui %0 : i1 to i32
    %c0_i32_0 = arith.constant 0 : i32
    %2 = arith.cmpi ne, %1, %c0_i32_0 : i32
    scf.if %2 {
      %cst_32 = arith.constant 0.000000e+00 : f32
      %38 = vector.broadcast %cst_32 : f32 to vector<8x128xf32>
      %c0_33 = arith.constant 0 : index
      %c0_34 = arith.constant 0 : index
      %39 = vector.load %arg9[%c0_33, %c0_34] : memref<8x128xf32, #tpu.memory_space<vmem>>, vector<8x128xf32>
      tpu.vector_store %arg9[%c0_33, %c0_34], %38 {strides = array<i32>} : memref<8x128xf32, #tpu.memory_space<vmem>>, vector<8x128xf32>,
      %cst_35 = arith.constant 0.000000e+00 : f32
      %40 = vector.broadcast %cst_35 : f32 to vector<8x128xf32>
      %c0_36 = arith.constant 0 : index
      %c0_37 = arith.constant 0 : index
      %41 = vector.load %arg10[%c0_36, %c0_37] : memref<8x128xf32, #tpu.memory_space<vmem>>, vector<8x128xf32>
      tpu.vector_store %arg10[%c0_36, %c0_37], %40 {strides = array<i32>} : memref<8x128xf32, #tpu.memory_space<vmem>>, vector<8x128xf32>,
      %cst_38 = arith.constant 0.000000e+00 : f32
      %42 = vector.broadcast %cst_38 : f32 to vector<8x128xf32>
      %c0_39 = arith.constant 0 : index
      %c0_40 = arith.constant 0 : index
      %43 = vector.load %arg11[%c0_39, %c0_40] : memref<8x128xf32, #tpu.memory_space<vmem>>, vector<8x128xf32>
      tpu.vector_store %arg11[%c0_39, %c0_40], %42 {strides = array<i32>} : memref<8x128xf32, #tpu.memory_space<vmem>>, vector<8x128xf32>,
      %cst_41 = arith.constant 0.000000e+00 : f32
      %44 = vector.broadcast %cst_41 : f32 to vector<8x128xf32>
      %c0_42 = arith.constant 0 : index
      %c0_43 = arith.constant 0 : index
      %45 = vector.load %arg12[%c0_42, %c0_43] : memref<8x128xf32, #tpu.memory_space<vmem>>, vector<8x128xf32>
      tpu.vector_store %arg12[%c0_42, %c0_43], %44 {strides = array<i32>} : memref<8x128xf32, #tpu.memory_space<vmem>>, vector<8x128xf32>,
    } else {
    }
    %c0 = arith.constant 0 : index
    %c0_1 = arith.constant 0 : index
    %3 = vector.load %arg9[%c0, %c0_1] : memref<8x128xf32, #tpu.memory_space<vmem>>, vector<8x128xf32>
    %c0_2 = arith.constant 0 : index
    %c0_3 = arith.constant 0 : index
    %4 = vector.load %arg2[%c0_2, %c0_3] : memref<8x128xf32, #tpu.memory_space<vmem>>, vector<8x128xf32>
    %5 = math.log %4 : vector<8x128xf32>
    %6 = vector.shape_cast %5 : vector<8x128xf32> to vector<1x8x128xf32>
    %cst = arith.constant dense<0.000000e+00> : vector<8x128xf32>
    %7 = vector.multi_reduction <add>, %6, %cst [0] : vector<1x8x128xf32> to vector<8x128xf32>
    %8 = arith.addf %3, %7 : vector<8x128xf32>
    %c0_4 = arith.constant 0 : index
    %c0_5 = arith.constant 0 : index
    %9 = vector.load %arg9[%c0_4, %c0_5] : memref<8x128xf32, #tpu.memory_space<vmem>>, vector<8x128xf32>
    tpu.vector_store %arg9[%c0_4, %c0_5], %8 {strides = array<i32>} : memref<8x128xf32, #tpu.memory_space<vmem>>, vector<8x128xf32>,
    %c0_6 = arith.constant 0 : index
    %c0_7 = arith.constant 0 : index
    %10 = vector.load %arg10[%c0_6, %c0_7] : memref<8x128xf32, #tpu.memory_space<vmem>>, vector<8x128xf32>
    %c0_8 = arith.constant 0 : index
    %c0_9 = arith.constant 0 : index
    %11 = vector.load %arg3[%c0_8, %c0_9] : memref<8x128xf32, #tpu.memory_space<vmem>>, vector<8x128xf32>
    %12 = math.log %11 : vector<8x128xf32>
    %13 = vector.shape_cast %12 : vector<8x128xf32> to vector<1x8x128xf32>
    %cst_10 = arith.constant dense<0.000000e+00> : vector<8x128xf32>
    %14 = vector.multi_reduction <add>, %13, %cst_10 [0] : vector<1x8x128xf32> to vector<8x128xf32>
    %15 = arith.addf %10, %14 : vector<8x128xf32>
    %c0_11 = arith.constant 0 : index
    %c0_12 = arith.constant 0 : index
    %16 = vector.load %arg10[%c0_11, %c0_12] : memref<8x128xf32, #tpu.memory_space<vmem>>, vector<8x128xf32>
    tpu.vector_store %arg10[%c0_11, %c0_12], %15 {strides = array<i32>} : memref<8x128xf32, #tpu.memory_space<vmem>>, vector<8x128xf32>,
    %c0_13 = arith.constant 0 : index
    %c0_14 = arith.constant 0 : index
    %17 = vector.load %arg4[%c0_13, %c0_14] : memref<8x128xf32, #tpu.memory_space<vmem>>, vector<8x128xf32>
    %c0_15 = arith.constant 0 : index
    %c0_16 = arith.constant 0 : index
    %18 = vector.load %arg5[%c0_15, %c0_16] : memref<8x128xf32, #tpu.memory_space<vmem>>, vector<8x128xf32>
    %19 = arith.subf %17, %18 : vector<8x128xf32>
    %c0_17 = arith.constant 0 : index
    %c0_18 = arith.constant 0 : index
    %20 = vector.load %arg11[%c0_17, %c0_18] : memref<8x128xf32, #tpu.memory_space<vmem>>, vector<8x128xf32>
    %21 = arith.mulf %19, %19 : vector<8x128xf32>
    %22 = vector.shape_cast %21 : vector<8x128xf32> to vector<1x8x128xf32>
    %cst_19 = arith.constant dense<0.000000e+00> : vector<8x128xf32>
    %23 = vector.multi_reduction <add>, %22, %cst_19 [0] : vector<1x8x128xf32> to vector<8x128xf32>
    %24 = arith.addf %20, %23 : vector<8x128xf32>
    %c0_20 = arith.constant 0 : index
    %c0_21 = arith.constant 0 : index
    %25 = vector.load %arg11[%c0_20, %c0_21] : memref<8x128xf32, #tpu.memory_space<vmem>>, vector<8x128xf32>
    tpu.vector_store %arg11[%c0_20, %c0_21], %24 {strides = array<i32>} : memref<8x128xf32, #tpu.memory_space<vmem>>, vector<8x128xf32>,
    %c0_22 = arith.constant 0 : index
    %c0_23 = arith.constant 0 : index
    %26 = vector.load %arg12[%c0_22, %c0_23] : memref<8x128xf32, #tpu.memory_space<vmem>>, vector<8x128xf32>
    %c0_24 = arith.constant 0 : index
    %c0_25 = arith.constant 0 : index
    %27 = vector.load %arg6[%c0_24, %c0_25] : memref<8x128xf32, #tpu.memory_space<vmem>>, vector<8x128xf32>
    %c0_26 = arith.constant 0 : index
    %c0_27 = arith.constant 0 : index
    %28 = vector.load %arg7[%c0_26, %c0_27] : memref<8x128xf32, #tpu.memory_space<vmem>>, vector<8x128xf32>
    %29 = arith.subf %27, %28 : vector<8x128xf32>
    %30 = math.absf %29 : vector<8x128xf32>
    %31 = vector.shape_cast %30 : vector<8x128xf32> to vector<1x8x128xf32>
    %cst_28 = arith.constant dense<0.000000e+00> : vector<8x128xf32>
    %32 = vector.multi_reduction <add>, %31, %cst_28 [0] : vector<1x8x128xf32> to vector<8x128xf32>
    %33 = arith.addf %26, %32 : vector<8x128xf32>
    %c0_29 = arith.constant 0 : index
    %c0_30 = arith.constant 0 : index
    %34 = vector.load %arg12[%c0_29, %c0_30] : memref<8x128xf32, #tpu.memory_space<vmem>>, vector<8x128xf32>
    tpu.vector_store %arg12[%c0_29, %c0_30], %33 {strides = array<i32>} : memref<8x128xf32, #tpu.memory_space<vmem>>, vector<8x128xf32>,
    %c1_i32 = arith.constant 1 : i32
    %35 = arith.cmpi eq, %arg1, %c1_i32 : i32
    %36 = arith.extui %35 : i1 to i32
    %c0_i32_31 = arith.constant 0 : i32
    %37 = arith.cmpi ne, %36, %c0_i32_31 : i32
    scf.if %37 {
      %c0_32 = arith.constant 0 : index
      %c0_33 = arith.constant 0 : index
      %38 = vector.load %arg9[%c0_32, %c0_33] : memref<8x128xf32, #tpu.memory_space<vmem>>, vector<8x128xf32>
      %cst_34 = arith.constant dense<0.000000e+00> : vector<128xf32>
      %39 = vector.multi_reduction <add>, %38, %cst_34 [0] : vector<8x128xf32> to vector<128xf32>
      %40 = vector.shape_cast %39 : vector<128xf32> to vector<1x128xf32>
      %cst_35 = arith.constant dense<0.000000e+00> : vector<1xf32>
      %41 = vector.multi_reduction <add>, %40, %cst_35 [1] : vector<1x128xf32> to vector<1xf32>
      %42 = vector.shape_cast %41 : vector<1xf32> to vector<1x1xf32>
      %cst_36 = arith.constant -0.00281776371 : f32
      %43 = vector.broadcast %cst_36 : f32 to vector<1x1xf32>
      %44 = arith.mulf %42, %43 : vector<1x1xf32>
      %c0_37 = arith.constant 0 : index
      %c0_38 = arith.constant 0 : index
      %45 = vector.load %arg10[%c0_37, %c0_38] : memref<8x128xf32, #tpu.memory_space<vmem>>, vector<8x128xf32>
      %cst_39 = arith.constant dense<0.000000e+00> : vector<128xf32>
      %46 = vector.multi_reduction <add>, %45, %cst_39 [0] : vector<8x128xf32> to vector<128xf32>
      %47 = vector.shape_cast %46 : vector<128xf32> to vector<1x128xf32>
      %cst_40 = arith.constant dense<0.000000e+00> : vector<1xf32>
      %48 = vector.multi_reduction <add>, %47, %cst_40 [1] : vector<1x128xf32> to vector<1xf32>
      %49 = vector.shape_cast %48 : vector<1xf32> to vector<1x1xf32>
      %cst_41 = arith.constant -0.00281776371 : f32
      %50 = vector.broadcast %cst_41 : f32 to vector<1x1xf32>
      %51 = arith.mulf %49, %50 : vector<1x1xf32>
      %52 = arith.addf %44, %51 : vector<1x1xf32>
      %c0_42 = arith.constant 0 : index
      %c0_43 = arith.constant 0 : index
      %53 = vector.load %arg11[%c0_42, %c0_43] : memref<8x128xf32, #tpu.memory_space<vmem>>, vector<8x128xf32>
      %cst_44 = arith.constant dense<0.000000e+00> : vector<128xf32>
      %54 = vector.multi_reduction <add>, %53, %cst_44 [0] : vector<8x128xf32> to vector<128xf32>
      %55 = vector.shape_cast %54 : vector<128xf32> to vector<1x128xf32>
      %cst_45 = arith.constant dense<0.000000e+00> : vector<1xf32>
      %56 = vector.multi_reduction <add>, %55, %cst_45 [1] : vector<1x128xf32> to vector<1xf32>
      %57 = vector.shape_cast %56 : vector<1xf32> to vector<1x1xf32>
      %cst_46 = arith.constant 42.3339844 : f32
      %58 = vector.broadcast %cst_46 : f32 to vector<1x1xf32>
      %59 = arith.mulf %57, %58 : vector<1x1xf32>
      %c0_47 = arith.constant 0 : index
      %c0_48 = arith.constant 0 : index
      %60 = vector.load %arg12[%c0_47, %c0_48] : memref<8x128xf32, #tpu.memory_space<vmem>>, vector<8x128xf32>
      %cst_49 = arith.constant dense<0.000000e+00> : vector<128xf32>
      %61 = vector.multi_reduction <add>, %60, %cst_49 [0] : vector<8x128xf32> to vector<128xf32>
      %62 = vector.shape_cast %61 : vector<128xf32> to vector<1x128xf32>
      %cst_50 = arith.constant dense<0.000000e+00> : vector<1xf32>
      %63 = vector.multi_reduction <add>, %62, %cst_50 [1] : vector<1x128xf32> to vector<1xf32>
      %64 = vector.shape_cast %63 : vector<1xf32> to vector<1x1xf32>
      %cst_51 = arith.constant 0.001953125 : f32
      %65 = vector.broadcast %cst_51 : f32 to vector<1x1xf32>
      %66 = arith.mulf %64, %65 : vector<1x1xf32>
      %cst_52 = arith.constant 0.00999999977 : f32
      %67 = vector.broadcast %cst_52 : f32 to vector<1x1xf32>
      %68 = arith.mulf %67, %59 : vector<1x1xf32>
      %69 = arith.addf %68, %52 : vector<1x1xf32>
      %cst_53 = arith.constant 1.000000e+00 : f32
      %70 = vector.broadcast %cst_53 : f32 to vector<1x1xf32>
      %71 = arith.mulf %70, %66 : vector<1x1xf32>
      %72 = arith.addf %69, %71 : vector<1x1xf32>
      %73 = tpu.iota {dimensions = array<i32: 1>} : vector<8x128xi32>
      %c0_i32_54 = arith.constant 0 : i32
      %74 = vector.broadcast %c0_i32_54 : i32 to vector<8x128xi32>
      %75 = arith.cmpi eq, %73, %74 : vector<8x128xi32>
      %cst_55 = arith.constant 0.000000e+00 : f32
      %76 = vector.shape_cast %52 : vector<1x1xf32> to vector<1x1xf32>
      %77 = vector.broadcast %76 : vector<1x1xf32> to vector<8x128xf32>
      %78 = vector.broadcast %cst_55 : f32 to vector<8x128xf32>
      %79 = arith.select %75, %77, %78 : vector<8x128xi1>, vector<8x128xf32>
      %c1_i32_56 = arith.constant 1 : i32
      %80 = vector.broadcast %c1_i32_56 : i32 to vector<8x128xi32>
      %81 = arith.cmpi eq, %73, %80 : vector<8x128xi32>
      %cst_57 = arith.constant 0.000000e+00 : f32
      %82 = vector.shape_cast %44 : vector<1x1xf32> to vector<1x1xf32>
      %83 = vector.broadcast %82 : vector<1x1xf32> to vector<8x128xf32>
      %84 = vector.broadcast %cst_57 : f32 to vector<8x128xf32>
      %85 = arith.select %81, %83, %84 : vector<8x128xi1>, vector<8x128xf32>
      %86 = arith.addf %79, %85 : vector<8x128xf32>
      %c2_i32 = arith.constant 2 : i32
      %87 = vector.broadcast %c2_i32 : i32 to vector<8x128xi32>
      %88 = arith.cmpi eq, %73, %87 : vector<8x128xi32>
      %cst_58 = arith.constant 0.000000e+00 : f32
      %89 = vector.shape_cast %51 : vector<1x1xf32> to vector<1x1xf32>
      %90 = vector.broadcast %89 : vector<1x1xf32> to vector<8x128xf32>
      %91 = vector.broadcast %cst_58 : f32 to vector<8x128xf32>
      %92 = arith.select %88, %90, %91 : vector<8x128xi1>, vector<8x128xf32>
      %93 = arith.addf %86, %92 : vector<8x128xf32>
      %c3_i32 = arith.constant 3 : i32
      %94 = vector.broadcast %c3_i32 : i32 to vector<8x128xi32>
      %95 = arith.cmpi eq, %73, %94 : vector<8x128xi32>
      %cst_59 = arith.constant 0.000000e+00 : f32
      %96 = vector.shape_cast %59 : vector<1x1xf32> to vector<1x1xf32>
      %97 = vector.broadcast %96 : vector<1x1xf32> to vector<8x128xf32>
      %98 = vector.broadcast %cst_59 : f32 to vector<8x128xf32>
      %99 = arith.select %95, %97, %98 : vector<8x128xi1>, vector<8x128xf32>
      %100 = arith.addf %93, %99 : vector<8x128xf32>
      %c4_i32 = arith.constant 4 : i32
      %101 = vector.broadcast %c4_i32 : i32 to vector<8x128xi32>
      %102 = arith.cmpi eq, %73, %101 : vector<8x128xi32>
      %cst_60 = arith.constant 0.000000e+00 : f32
      %103 = vector.shape_cast %66 : vector<1x1xf32> to vector<1x1xf32>
      %104 = vector.broadcast %103 : vector<1x1xf32> to vector<8x128xf32>
      %105 = vector.broadcast %cst_60 : f32 to vector<8x128xf32>
      %106 = arith.select %102, %104, %105 : vector<8x128xi1>, vector<8x128xf32>
      %107 = arith.addf %100, %106 : vector<8x128xf32>
      %c5_i32 = arith.constant 5 : i32
      %108 = vector.broadcast %c5_i32 : i32 to vector<8x128xi32>
      %109 = arith.cmpi eq, %73, %108 : vector<8x128xi32>
      %cst_61 = arith.constant 0.000000e+00 : f32
      %110 = vector.shape_cast %72 : vector<1x1xf32> to vector<1x1xf32>
      %111 = vector.broadcast %110 : vector<1x1xf32> to vector<8x128xf32>
      %112 = vector.broadcast %cst_61 : f32 to vector<8x128xf32>
      %113 = arith.select %109, %111, %112 : vector<8x128xi1>, vector<8x128xf32>
      %114 = arith.addf %107, %113 : vector<8x128xf32>
      %115 = vector.shape_cast %114 : vector<8x128xf32> to vector<1x8x128xf32>
      %c0_62 = arith.constant 0 : index
      %c0_63 = arith.constant 0 : index
      %c0_64 = arith.constant 0 : index
      %116 = vector.load %arg8[%c0_62, %c0_63, %c0_64] : memref<1x8x128xf32, #tpu.memory_space<vmem>>, vector<1x8x128xf32>
      tpu.vector_store %arg8[%c0_62, %c0_63, %c0_64], %115 {strides = array<i32>} : memref<1x8x128xf32, #tpu.memory_space<vmem>>, vector<1x8x128xf32>,
    } else {
    }
    return
  }
  func.func @transform_0(%arg0: i32, %arg1: i32) -> (i32, i32) {
    %c2_i32 = arith.constant 2 : i32
    %0 = arith.muli %arg0, %c2_i32 : i32
    %1 = arith.addi %0, %arg1 : i32
    %c0_i32 = arith.constant 0 : i32
    %c0_i32_0 = arith.constant 0 : i32
    return %1, %c0_i32 : i32, i32
  }
  func.func @transform_1(%arg0: i32, %arg1: i32) -> (i32, i32) {
    %c2_i32 = arith.constant 2 : i32
    %0 = arith.muli %arg0, %c2_i32 : i32
    %1 = arith.addi %0, %arg1 : i32
    %c0_i32 = arith.constant 0 : i32
    %c0_i32_0 = arith.constant 0 : i32
    return %1, %c0_i32 : i32, i32
  }
  func.func @transform_2(%arg0: i32, %arg1: i32) -> (i32, i32) {
    %c2_i32 = arith.constant 2 : i32
    %0 = arith.muli %arg0, %c2_i32 : i32
    %1 = arith.addi %0, %arg1 : i32
    %c0_i32 = arith.constant 0 : i32
    %c0_i32_0 = arith.constant 0 : i32
    return %1, %c0_i32 : i32, i32
  }
  func.func @transform_3(%arg0: i32, %arg1: i32) -> (i32, i32) {
    %c2_i32 = arith.constant 2 : i32
    %0 = arith.muli %arg0, %c2_i32 : i32
    %1 = arith.addi %0, %arg1 : i32
    %c0_i32 = arith.constant 0 : i32
    %c0_i32_0 = arith.constant 0 : i32
    return %1, %c0_i32 : i32, i32
  }
  func.func @transform_4(%arg0: i32, %arg1: i32) -> (i32, i32) {
    %c2_i32 = arith.constant 2 : i32
    %0 = arith.muli %arg0, %c2_i32 : i32
    %1 = arith.addi %0, %arg1 : i32
    %c0_i32 = arith.constant 0 : i32
    %c0_i32_0 = arith.constant 0 : i32
    return %1, %c0_i32 : i32, i32
  }
  func.func @transform_5(%arg0: i32, %arg1: i32) -> (i32, i32) {
    %c2_i32 = arith.constant 2 : i32
    %0 = arith.muli %arg0, %c2_i32 : i32
    %1 = arith.addi %0, %arg1 : i32
    %c0_i32 = arith.constant 0 : i32
    %c0_i32_0 = arith.constant 0 : i32
    return %1, %c0_i32 : i32, i32
  }
  func.func @transform_6(%arg0: i32, %arg1: i32) -> (i32, i32, i32) {
    %c0_i32 = arith.constant 0 : i32
    %c0_i32_0 = arith.constant 0 : i32
    %c0_i32_1 = arith.constant 0 : i32
    return %arg0, %c0_i32, %c0_i32_0 : i32, i32, i32
  }
}

</mosaic_0001>

<llo_original>
// kernel: tpu_custom_call.1
$region0: #{tpu_custom_call.1}
  #allocation0 [shape = 'u32[]', space=smem, size = 0x4, offset = 0x4, fixed_abs, tag = 'smem constant byte address 0x4 - core index']
  #allocation1 [shape = 'u32[144,128]{1,0:T(1,128)}', space=vmem, size = 0x12000, scoped, tag = 'internal scratch']
  #allocation2 [shape = 'f32[8,128]{1,0:T(8,128)}', space=vmem, size = 0x1000, scoped, tag = 'scratch operand']
  #allocation3 [shape = 'f32[8,128]{1,0:T(8,128)}', space=vmem, size = 0x1000, scoped, tag = 'scratch operand']
  #allocation4 [shape = 'f32[8,128]{1,0:T(8,128)}', space=vmem, size = 0x1000, scoped, tag = 'scratch operand']
  #allocation5 [shape = 'f32[8,128]{1,0:T(8,128)}', space=vmem, size = 0x1000, scoped, tag = 'scratch operand']
  %s0 = inlined_call_operand.hbm [shape: f32[32,128], index: 0, kind: input, shape index: {}]
  %s1 = inlined_call_operand.hbm [shape: f32[32,128], index: 1, kind: input, shape index: {}]
  %s2 = inlined_call_operand.hbm [shape: f32[32,128], index: 2, kind: input, shape index: {}]
  %s3 = inlined_call_operand.hbm [shape: f32[32,128], index: 3, kind: input, shape index: {}]
  %s4 = inlined_call_operand.hbm [shape: f32[32,128], index: 4, kind: input, shape index: {}]
  %s5 = inlined_call_operand.hbm [shape: f32[32,128], index: 5, kind: input, shape index: {}]
  %s6 = inlined_call_operand.hbm [shape: f32[2,8,128], index: 6, kind: output, shape index: {}]
  %s7 = sld [smem:[#allocation0]]
  $region89: #{tpu_custom_call.1} parent=0
    _
  %s9 = ssub.s32 1, %s7
  %s10 = scalar_select 0, %s9, %s7
  $region1: #{tpu_custom_call.1} parent=0
    #allocation6 [shape = 'u8[8192]{0}', space=vmem, size = 0x2000, scoped, tag = 'input window, operand 0']
    #allocation7 [shape = 's32[2]{0}', space=sflag, size = 0x8, scoped, tag = 'scoped memory for tpu_custom_call.1']
    #allocation8 [shape = 's32[2]{0}', space=sflag, size = 0x8, scoped, tag = 'scoped memory for tpu_custom_call.1']
    #allocation9 [shape = 'u8[8192]{0}', space=vmem, size = 0x2000, scoped, tag = 'input window, operand 1']
    #allocation10 [shape = 's32[2]{0}', space=sflag, size = 0x8, scoped, tag = 'scoped memory for tpu_custom_call.1']
    #allocation11 [shape = 'u8[8192]{0}', space=vmem, size = 0x2000, scoped, tag = 'input window, operand 2']
    #allocation12 [shape = 'u8[8192]{0}', space=vmem, size = 0x2000, scoped, tag = 'input window, operand 3']
    #allocation13 [shape = 's32[2]{0}', space=sflag, size = 0x8, scoped, tag = 'scoped memory for tpu_custom_call.1']
    #allocation14 [shape = 'u8[8192]{0}', space=vmem, size = 0x2000, scoped, tag = 'input window, operand 4']
    #allocation15 [shape = 'u8[8192]{0}', space=vmem, size = 0x2000, scoped, tag = 'input window, operand 5']
    #allocation16 [shape = 's32[2]{0}', space=sflag, size = 0x8, scoped, tag = 'scoped memory for tpu_custom_call.1']
    #allocation17 [shape = 'u8[8192]{0}', space=vmem, size = 0x2000, scoped, tag = 'output window, operand 0']
    %11 = vsyncpa [#allocation7], 0
    %s12 = scalar_lea.sflag [#allocation7], 1
    %13 = vsyncpa %s12, 0
    %14 = vsyncpa [#allocation10], 0
    %s15 = scalar_lea.sflag [#allocation10], 1
    %16 = vsyncpa %s15, 0
    %17 = vsyncpa [#allocation13], 0
    %s18 = scalar_lea.sflag [#allocation13], 1
    %19 = vsyncpa %s18, 0
    %20 = vsyncpa [#allocation16], 0
    %s21 = scalar_lea.sflag [#allocation16], 1
    %22 = vsyncpa %s21, 0
    %23 = vsyncpa [#allocation8], 0
    %s24 = scalar_lea.sflag [#allocation8], 1
    %25 = vsyncpa %s24, 0
    loop: start=0, step=1, limit=6
    $region2: #{tpu_custom_call.1} parent=1 // loop_pre_header
      _
    $region3: #{tpu_custom_call.1} parent=1 // loop_header
      %s27 = sphi 0, %s31
      %p28 = scmp.ge.s32.totalorder %s27, 6
      %s34 = sphi 0, %s46
      %s35 = sphi 0, %s42
      %s36 = sphi 0, %s34
      %s37 = sphi 0, %s35
      %s38 = sphi 0, %s36
      %s39 = sphi 0, %s37
      %s53 = sphi 0, %s55
      %s56 = sphi 0, %s53
      %s57 = sphi 0, %s56
      %s73 = sphi 0, %s57
      %s83 = sphi 0, %s85
      %s86 = sphi 0, %s83
      %s87 = sphi 0, %s86
      %s103 = sphi 0, %s87
      %s113 = sphi 0, %s115
      %s116 = sphi 0, %s113
      %s117 = sphi 0, %s116
      %s133 = sphi 0, %s117
      %s143 = sphi 0, %s145
      %s146 = sphi 0, %s143
      %s147 = sphi 0, %s146
      %s163 = sphi 0, %s147
      %s173 = sphi 0, %s175
      %s176 = sphi 0, %s173
      %s177 = sphi 0, %s176
      %s193 = sphi 0, %s177
      %s203 = sphi 0, %s205
      %s206 = sphi 0, %s203
      %s207 = sphi 0, %s206
      %s223 = sphi 0, %s207
      %s229 = sphi 0, %s231
      %s232 = sphi 0, %s229
      %s233 = sphi 0, %s232
      %s249 = sphi 0, %s233
    $region4: #{tpu_custom_call.1} parent=1 // loop_header_branch
      %30 = sbr.rel (%p28) target = $region8
    $region5: #{tpu_custom_call.1} parent=1 // loop_body
      %s32 = ssub.s32 %s27, 1
      %s33 = ssub.s32 %s27, 2
      %s40 = sadd.s32 1, %s35
      %p41 = scmp.ge.s32.totalorder %s40, 2
      %s42 = scalar_select %p41, 0, %s40
      %s43 = sadd.s32 1, %s34
      %s44 = scalar_select %p41, %s43, %s34
      %p45 = scmp.ge.s32.totalorder %s44, 2
      %s46 = scalar_select %p45, 0, %s44
      %s47 = smul.u32 %s34, 2
      %s48 = sadd.s32 %s47, %s35
      %s49 = smul.u32 %s46, 2
      %s50 = sadd.s32 %s49, %s42
      %s51 = ssub.s32 %s48, %s50
      %p52 = scmp.eq.s32.totalorder %s51, 0
      %s54 = sadd.s32 %s53, 1
      %s55 = scalar_select %p52, %s53, %s54
      %p58 = pneg %p52
      %p59 = scmp.eq.s32.totalorder %s27, 3
      %p60 = por %p58, %p59
      %p61 = scmp.ne.s32.totalorder %s53, %s56
      %p62 = scmp.eq.s32.totalorder %s27, 0
      %p63 = por %p61, %p62
      %p64 = scmp.ne.s32.totalorder %s53, %s56
      %p65 = scmp.eq.s32.totalorder %s32, 3
      %p66 = por %p64, %p65
      %p67 = scmp.ne.s32.totalorder %s56, %s57
      %p68 = scmp.eq.s32.totalorder %s32, 0
      %p69 = por %p67, %p68
      %p70 = scmp.ne.s32.totalorder %s56, %s57
      %p71 = scmp.eq.s32.totalorder %s33, 3
      %p72 = por %p70, %p71
      %p74 = scmp.ne.s32.totalorder %s57, %s73
      %p75 = scmp.eq.s32.totalorder %s33, 0
      %p76 = por %p74, %p75
      %s77 = smul.u32 %s34, 2
      %s78 = sadd.s32 %s77, %s35
      %s79 = smul.u32 %s46, 2
      %s80 = sadd.s32 %s79, %s42
      %s81 = ssub.s32 %s78, %s80
      %p82 = scmp.eq.s32.totalorder %s81, 0
      %s84 = sadd.s32 %s83, 1
      %s85 = scalar_select %p82, %s83, %s84
      %p88 = pneg %p82
      %p89 = scmp.eq.s32.totalorder %s27, 3
      %p90 = por %p88, %p89
      %p91 = scmp.ne.s32.totalorder %s83, %s86
      %p92 = scmp.eq.s32.totalorder %s27, 0
      %p93 = por %p91, %p92
      %p94 = scmp.ne.s32.totalorder %s83, %s86
      %p95 = scmp.eq.s32.totalorder %s32, 3
      %p96 = por %p94, %p95
      %p97 = scmp.ne.s32.totalorder %s86, %s87
      %p98 = scmp.eq.s32.totalorder %s32, 0
      %p99 = por %p97, %p98
      %p100 = scmp.ne.s32.totalorder %s86, %s87
      %p101 = scmp.eq.s32.totalorder %s33, 3
      %p102 = por %p100, %p101
      %p104 = scmp.ne.s32.totalorder %s87, %s103
      %p105 = scmp.eq.s32.totalorder %s33, 0
      %p106 = por %p104, %p105
      %s107 = smul.u32 %s34, 2
      %s108 = sadd.s32 %s107, %s35
      %s109 = smul.u32 %s46, 2
      %s110 = sadd.s32 %s109, %s42
      %s111 = ssub.s32 %s108, %s110
      %p112 = scmp.eq.s32.totalorder %s111, 0
      %s114 = sadd.s32 %s113, 1
      %s115 = scalar_select %p112, %s113, %s114
      %p118 = pneg %p112
      %p119 = scmp.eq.s32.totalorder %s27, 3
      %p120 = por %p118, %p119
      %p121 = scmp.ne.s32.totalorder %s113, %s116
      %p122 = scmp.eq.s32.totalorder %s27, 0
      %p123 = por %p121, %p122
      %p124 = scmp.ne.s32.totalorder %s113, %s116
      %p125 = scmp.eq.s32.totalorder %s32, 3
      %p126 = por %p124, %p125
      %p127 = scmp.ne.s32.totalorder %s116, %s117
      %p128 = scmp.eq.s32.totalorder %s32, 0
      %p129 = por %p127, %p128
      %p130 = scmp.ne.s32.totalorder %s116, %s117
      %p131 = scmp.eq.s32.totalorder %s33, 3
      %p132 = por %p130, %p131
      %p134 = scmp.ne.s32.totalorder %s117, %s133
      %p135 = scmp.eq.s32.totalorder %s33, 0
      %p136 = por %p134, %p135
      %s137 = smul.u32 %s34, 2
      %s138 = sadd.s32 %s137, %s35
      %s139 = smul.u32 %s46, 2
      %s140 = sadd.s32 %s139, %s42
      %s141 = ssub.s32 %s138, %s140
      %p142 = scmp.eq.s32.totalorder %s141, 0
      %s144 = sadd.s32 %s143, 1
      %s145 = scalar_select %p142, %s143, %s144
      %p148 = pneg %p142
      %p149 = scmp.eq.s32.totalorder %s27, 3
      %p150 = por %p148, %p149
      %p151 = scmp.ne.s32.totalorder %s143, %s146
      %p152 = scmp.eq.s32.totalorder %s27, 0
      %p153 = por %p151, %p152
      %p154 = scmp.ne.s32.totalorder %s143, %s146
      %p155 = scmp.eq.s32.totalorder %s32, 3
      %p156 = por %p154, %p155
      %p157 = scmp.ne.s32.totalorder %s146, %s147
      %p158 = scmp.eq.s32.totalorder %s32, 0
      %p159 = por %p157, %p158
      %p160 = scmp.ne.s32.totalorder %s146, %s147
      %p161 = scmp.eq.s32.totalorder %s33, 3
      %p162 = por %p160, %p161
      %p164 = scmp.ne.s32.totalorder %s147, %s163
      %p165 = scmp.eq.s32.totalorder %s33, 0
      %p166 = por %p164, %p165
      %s167 = smul.u32 %s34, 2
      %s168 = sadd.s32 %s167, %s35
      %s169 = smul.u32 %s46, 2
      %s170 = sadd.s32 %s169, %s42
      %s171 = ssub.s32 %s168, %s170
      %p172 = scmp.eq.s32.totalorder %s171, 0
      %s174 = sadd.s32 %s173, 1
      %s175 = scalar_select %p172, %s173, %s174
      %p178 = pneg %p172
      %p179 = scmp.eq.s32.totalorder %s27, 3
      %p180 = por %p178, %p179
      %p181 = scmp.ne.s32.totalorder %s173, %s176
      %p182 = scmp.eq.s32.totalorder %s27, 0
      %p183 = por %p181, %p182
      %p184 = scmp.ne.s32.totalorder %s173, %s176
      %p185 = scmp.eq.s32.totalorder %s32, 3
      %p186 = por %p184, %p185
      %p187 = scmp.ne.s32.totalorder %s176, %s177
      %p188 = scmp.eq.s32.totalorder %s32, 0
      %p189 = por %p187, %p188
      %p190 = scmp.ne.s32.totalorder %s176, %s177
      %p191 = scmp.eq.s32.totalorder %s33, 3
      %p192 = por %p190, %p191
      %p194 = scmp.ne.s32.totalorder %s177, %s193
      %p195 = scmp.eq.s32.totalorder %s33, 0
      %p196 = por %p194, %p195
      %s197 = smul.u32 %s34, 2
      %s198 = sadd.s32 %s197, %s35
      %s199 = smul.u32 %s46, 2
      %s200 = sadd.s32 %s199, %s42
      %s201 = ssub.s32 %s198, %s200
      %p202 = scmp.eq.s32.totalorder %s201, 0
      %s204 = sadd.s32 %s203, 1
      %s205 = scalar_select %p202, %s203, %s204
      %p208 = pneg %p202
      %p209 = scmp.eq.s32.totalorder %s27, 3
      %p210 = por %p208, %p209
      %p211 = scmp.ne.s32.totalorder %s203, %s206
      %p212 = scmp.eq.s32.totalorder %s27, 0
      %p213 = por %p211, %p212
      %p214 = scmp.ne.s32.totalorder %s203, %s206
      %p215 = scmp.eq.s32.totalorder %s32, 3
      %p216 = por %p214, %p215
      %p217 = scmp.ne.s32.totalorder %s206, %s207
      %p218 = scmp.eq.s32.totalorder %s32, 0
      %p219 = por %p217, %p218
      %p220 = scmp.ne.s32.totalorder %s206, %s207
      %p221 = scmp.eq.s32.totalorder %s33, 3
      %p222 = por %p220, %p221
      %p224 = scmp.ne.s32.totalorder %s207, %s223
      %p225 = scmp.eq.s32.totalorder %s33, 0
      %p226 = por %p224, %p225
      %s227 = ssub.s32 %s34, %s46
      %p228 = scmp.eq.s32.totalorder %s227, 0
      %s230 = sadd.s32 %s229, 1
      %s231 = scalar_select %p228, %s229, %s230
      %p234 = pneg %p228
      %p235 = scmp.eq.s32.totalorder %s27, 3
      %p236 = por %p234, %p235
      %p237 = scmp.ne.s32.totalorder %s229, %s232
      %p238 = scmp.eq.s32.totalorder %s27, 0
      %p239 = por %p237, %p238
      %p240 = scmp.ne.s32.totalorder %s229, %s232
      %p241 = scmp.eq.s32.totalorder %s32, 3
      %p242 = por %p240, %p241
      %p243 = scmp.ne.s32.totalorder %s232, %s233
      %p244 = scmp.eq.s32.totalorder %s32, 0
      %p245 = por %p243, %p244
      %p246 = scmp.ne.s32.totalorder %s232, %s233
      %p247 = scmp.eq.s32.totalorder %s33, 3
      %p248 = por %p246, %p247
      %p250 = scmp.ne.s32.totalorder %s233, %s249
      %p251 = scmp.eq.s32.totalorder %s33, 0
      %p252 = por %p250, %p251
      %p253 = scmp.le.s32.totalorder 1, %s27
      %p254 = scmp.lt.s32.totalorder %s27, 5
      %p255 = pnand %p253, %p254
      %p256 = pneg %p255
      // Predicated region
      $region9: #{tpu_custom_call.1} parent=5 // pred_check
        _
      $region10: #{tpu_custom_call.1} parent=5 // pred_check_branch
        %258 = sbr.rel (%p255) target = $region12
      $region11: #{tpu_custom_call.1} parent=5 // pred_region
        %s259 = ssub.s32 %s27, 1
      $region12: #{tpu_custom_call.1} parent=5 // pred_fallthru
        _
      %p260 = scmp.lt.s32.totalorder %s27, 4
      // Predicated region
      $region13: #{tpu_custom_call.1} parent=5 // pred_check
        %p261 = pneg %p260
      $region14: #{tpu_custom_call.1} parent=5 // pred_check_branch
        %263 = sbr.rel (%p261) target = $region16
      $region15: #{tpu_custom_call.1} parent=5 // pred_region
        // Predicated region
        $region17: #{tpu_custom_call.1} parent=15 // pred_check
          %p264 = pneg %p63
        $region18: #{tpu_custom_call.1} parent=15 // pred_check_branch
          %266 = sbr.rel (%p264) target = $region20
        $region19: #{tpu_custom_call.1} parent=15 // pred_region
          %s267 = sand.u32 %s53, 1
          %s268 = scalar_lea.sflag [#allocation7], %s267
          %s269 = sand.u32 %s53, 1
          %s270 = smul.addr %s269, 8
          %s271 = scalar_lea.vmem [#allocation6], %s270
          %s272 = smul.u32 %s34, 2
          %s273 = sadd.s32 %s272, %s35
          %s275 = ssub.s32 128, 128
          %276 = vsyncadd %s268, %s275
          %s277 = smul.addr %s273, 128
          %s278 = scalar_lea.hbm %s0, %s277
          %s280 = sshll.u32 %s271, 4
          %s281 = int_to_ptr.vmem [resolvable:$true] %s280
          %283 = dma.hbm_to_vmem [thread:$0]  %s278, 128, %s281, %s268
        $region20: #{tpu_custom_call.1} parent=15 // pred_fallthru
          _
        // Predicated region
        $region21: #{tpu_custom_call.1} parent=15 // pred_check
          %p284 = pneg %p93
        $region22: #{tpu_custom_call.1} parent=15 // pred_check_branch
          %286 = sbr.rel (%p284) target = $region24
        $region23: #{tpu_custom_call.1} parent=15 // pred_region
          %s287 = sand.u32 %s27, 1
          %s288 = scalar_lea.sflag [#allocation10], %s287
          %s289 = sand.u32 %s83, 1
          %s290 = smul.addr %s289, 8
          %s291 = scalar_lea.vmem [#allocation9], %s290
          %s292 = smul.u32 %s34, 2
          %s293 = sadd.s32 %s292, %s35
          %s295 = ssub.s32 128, 128
          %296 = vsyncadd %s288, %s295
          %s297 = smul.addr %s293, 128
          %s298 = scalar_lea.hbm %s1, %s297
          %s300 = sshll.u32 %s291, 4
          %s301 = int_to_ptr.vmem [resolvable:$true] %s300
          %303 = dma.hbm_to_vmem [thread:$0]  %s298, 128, %s301, %s288
        $region24: #{tpu_custom_call.1} parent=15 // pred_fallthru
          _
        // Predicated region
        $region25: #{tpu_custom_call.1} parent=15 // pred_check
          %p304 = pneg %p123
        $region26: #{tpu_custom_call.1} parent=15 // pred_check_branch
          %306 = sbr.rel (%p304) target = $region28
        $region27: #{tpu_custom_call.1} parent=15 // pred_region
          %s307 = sand.u32 %s27, 1
          %s308 = scalar_lea.sflag [#allocation10], %s307
          %s309 = sand.u32 %s113, 1
          %s310 = smul.addr %s309, 8
          %s311 = scalar_lea.vmem [#allocation11], %s310
          %s312 = smul.u32 %s34, 2
          %s313 = sadd.s32 %s312, %s35
          %s315 = ssub.s32 128, 128
          %316 = vsyncadd %s308, %s315
          %s317 = smul.addr %s313, 128
          %s318 = scalar_lea.hbm %s2, %s317
          %s320 = sshll.u32 %s311, 4
          %s321 = int_to_ptr.vmem [resolvable:$true] %s320
          %323 = dma.hbm_to_vmem [thread:$0]  %s318, 128, %s321, %s308
        $region28: #{tpu_custom_call.1} parent=15 // pred_fallthru
          _
        // Predicated region
        $region29: #{tpu_custom_call.1} parent=15 // pred_check
          %p324 = pneg %p153
        $region30: #{tpu_custom_call.1} parent=15 // pred_check_branch
          %326 = sbr.rel (%p324) target = $region32
        $region31: #{tpu_custom_call.1} parent=15 // pred_region
          %s327 = sand.u32 %s27, 1
          %s328 = scalar_lea.sflag [#allocation13], %s327
          %s329 = sand.u32 %s143, 1
          %s330 = smul.addr %s329, 8
          %s331 = scalar_lea.vmem [#allocation12], %s330
          %s332 = smul.u32 %s34, 2
          %s333 = sadd.s32 %s332, %s35
          %s335 = ssub.s32 128, 128
          %336 = vsyncadd %s328, %s335
          %s337 = smul.addr %s333, 128
          %s338 = scalar_lea.hbm %s3, %s337
          %s340 = sshll.u32 %s331, 4
          %s341 = int_to_ptr.vmem [resolvable:$true] %s340
          %343 = dma.hbm_to_vmem [thread:$0]  %s338, 128, %s341, %s328
        $region32: #{tpu_custom_call.1} parent=15 // pred_fallthru
          _
        // Predicated region
        $region33: #{tpu_custom_call.1} parent=15 // pred_check
          %p344 = pneg %p183
        $region34: #{tpu_custom_call.1} parent=15 // pred_check_branch
          %346 = sbr.rel (%p344) target = $region36
        $region35: #{tpu_custom_call.1} parent=15 // pred_region
          %s347 = sand.u32 %s27, 1
          %s348 = scalar_lea.sflag [#allocation13], %s347
          %s349 = sand.u32 %s173, 1
          %s350 = smul.addr %s349, 8
          %s351 = scalar_lea.vmem [#allocation14], %s350
          %s352 = smul.u32 %s34, 2
          %s353 = sadd.s32 %s352, %s35
          %s355 = ssub.s32 128, 128
          %356 = vsyncadd %s348, %s355
          %s357 = smul.addr %s353, 128
          %s358 = scalar_lea.hbm %s4, %s357
          %s360 = sshll.u32 %s351, 4
          %s361 = int_to_ptr.vmem [resolvable:$true] %s360
          %363 = dma.hbm_to_vmem [thread:$0]  %s358, 128, %s361, %s348
        $region36: #{tpu_custom_call.1} parent=15 // pred_fallthru
          _
        // Predicated region
        $region37: #{tpu_custom_call.1} parent=15 // pred_check
          %p364 = pneg %p213
        $region38: #{tpu_custom_call.1} parent=15 // pred_check_branch
          %366 = sbr.rel (%p364) target = $region40
        $region39: #{tpu_custom_call.1} parent=15 // pred_region
          %s367 = sand.u32 %s203, 1
          %s368 = scalar_lea.sflag [#allocation16], %s367
          %s369 = sand.u32 %s203, 1
          %s370 = smul.addr %s369, 8
          %s371 = scalar_lea.vmem [#allocation15], %s370
          %s372 = smul.u32 %s34, 2
          %s373 = sadd.s32 %s372, %s35
          %s375 = ssub.s32 128, 128
          %376 = vsyncadd %s368, %s375
          %s377 = smul.addr %s373, 128
          %s378 = scalar_lea.hbm %s5, %s377
          %s380 = sshll.u32 %s371, 4
          %s381 = int_to_ptr.vmem [resolvable:$true] %s380
          %383 = dma.hbm_to_vmem [thread:$0]  %s378, 128, %s381, %s368
        $region40: #{tpu_custom_call.1} parent=15 // pred_fallthru
          _
      $region16: #{tpu_custom_call.1} parent=5 // pred_fallthru
        _
      %p384 = scmp.le.s32.totalorder 1, %s27
      %p385 = scmp.lt.s32.totalorder %s27, 5
      %p386 = pnand %p384, %p385
      %p387 = pneg %p386
      // Predicated region
      $region41: #{tpu_custom_call.1} parent=5 // pred_check
        _
      $region42: #{tpu_custom_call.1} parent=5 // pred_check_branch
        %389 = sbr.rel (%p386) target = $region44
      $region43: #{tpu_custom_call.1} parent=5 // pred_region
        %s390 = ssub.s32 %s27, 1
        %s391 = sand.u32 %s56, 1
        %s392 = scalar_lea.sflag [#allocation7], %s391
        %s393 = sand.u32 %s56, 1
        %s394 = smul.addr %s393, 8
        %s395 = scalar_lea.vmem [#allocation6], %s394
        // Predicated region
        $region45: #{tpu_custom_call.1} parent=43 // pred_check
          %p396 = pneg %p69
        $region46: #{tpu_custom_call.1} parent=43 // pred_check_branch
          %398 = sbr.rel (%p396) target = $region48
        $region47: #{tpu_custom_call.1} parent=43 // pred_region
          %399 = dma.done %s392, 128
        $region48: #{tpu_custom_call.1} parent=43 // pred_fallthru
          _
        %s400 = sand.u32 %s32, 1
        %s401 = scalar_lea.sflag [#allocation10], %s400
        %s402 = sand.u32 %s86, 1
        %s403 = smul.addr %s402, 8
        %s404 = scalar_lea.vmem [#allocation9], %s403
        // Predicated region
        $region49: #{tpu_custom_call.1} parent=43 // pred_check
          %p405 = pneg %p99
        $region50: #{tpu_custom_call.1} parent=43 // pred_check_branch
          %407 = sbr.rel (%p405) target = $region52
        $region51: #{tpu_custom_call.1} parent=43 // pred_region
          %408 = dma.done %s401, 128
        $region52: #{tpu_custom_call.1} parent=43 // pred_fallthru
          _
        %s409 = sand.u32 %s32, 1
        %s410 = scalar_lea.sflag [#allocation10], %s409
        %s411 = sand.u32 %s116, 1
        %s412 = smul.addr %s411, 8
        %s413 = scalar_lea.vmem [#allocation11], %s412
        // Predicated region
        $region53: #{tpu_custom_call.1} parent=43 // pred_check
          %p414 = pneg %p129
        $region54: #{tpu_custom_call.1} parent=43 // pred_check_branch
          %416 = sbr.rel (%p414) target = $region56
        $region55: #{tpu_custom_call.1} parent=43 // pred_region
          %417 = dma.done %s410, 128
        $region56: #{tpu_custom_call.1} parent=43 // pred_fallthru
          _
        %s418 = sand.u32 %s32, 1
        %s419 = scalar_lea.sflag [#allocation13], %s418
        %s420 = sand.u32 %s146, 1
        %s421 = smul.addr %s420, 8
        %s422 = scalar_lea.vmem [#allocation12], %s421
        // Predicated region
        $region57: #{tpu_custom_call.1} parent=43 // pred_check
          %p423 = pneg %p159
        $region58: #{tpu_custom_call.1} parent=43 // pred_check_branch
          %425 = sbr.rel (%p423) target = $region60
        $region59: #{tpu_custom_call.1} parent=43 // pred_region
          %426 = dma.done %s419, 128
        $region60: #{tpu_custom_call.1} parent=43 // pred_fallthru
          _
        %s427 = sand.u32 %s32, 1
        %s428 = scalar_lea.sflag [#allocation13], %s427
        %s429 = sand.u32 %s176, 1
        %s430 = smul.addr %s429, 8
        %s431 = scalar_lea.vmem [#allocation14], %s430
        // Predicated region
        $region61: #{tpu_custom_call.1} parent=43 // pred_check
          %p432 = pneg %p189
        $region62: #{tpu_custom_call.1} parent=43 // pred_check_branch
          %434 = sbr.rel (%p432) target = $region64
        $region63: #{tpu_custom_call.1} parent=43 // pred_region
          %435 = dma.done %s428, 128
        $region64: #{tpu_custom_call.1} parent=43 // pred_fallthru
          _
        %s436 = sand.u32 %s206, 1
        %s437 = scalar_lea.sflag [#allocation16], %s436
        %s438 = sand.u32 %s206, 1
        %s439 = smul.addr %s438, 8
        %s440 = scalar_lea.vmem [#allocation15], %s439
        // Predicated region
        $region65: #{tpu_custom_call.1} parent=43 // pred_check
          %p441 = pneg %p219
        $region66: #{tpu_custom_call.1} parent=43 // pred_check_branch
          %443 = sbr.rel (%p441) target = $region68
        $region67: #{tpu_custom_call.1} parent=43 // pred_region
          %444 = dma.done %s437, 128
        $region68: #{tpu_custom_call.1} parent=43 // pred_fallthru
          _
        %s445 = sand.u32 %s56, 1
        %s446 = scalar_lea.sflag [#allocation7], %s445
        %s447 = sand.u32 %s56, 1
        %s448 = smul.addr %s447, 8
        %s449 = scalar_lea.vmem [#allocation6], %s448
        %p450 = pneg %p69
        %p451 = pneg %p66
        %s452 = sand.u32 %s32, 1
        %s453 = scalar_lea.sflag [#allocation10], %s452
        %s454 = sand.u32 %s86, 1
        %s455 = smul.addr %s454, 8
        %s456 = scalar_lea.vmem [#allocation9], %s455
        %p457 = pneg %p99
        %p458 = pneg %p96
        %s459 = sand.u32 %s32, 1
        %s460 = scalar_lea.sflag [#allocation10], %s459
        %s461 = sand.u32 %s116, 1
        %s462 = smul.addr %s461, 8
        %s463 = scalar_lea.vmem [#allocation11], %s462
        %p464 = pneg %p129
        %p465 = pneg %p126
        %s466 = sand.u32 %s32, 1
        %s467 = scalar_lea.sflag [#allocation13], %s466
        %s468 = sand.u32 %s146, 1
        %s469 = smul.addr %s468, 8
        %s470 = scalar_lea.vmem [#allocation12], %s469
        %p471 = pneg %p159
        %p472 = pneg %p156
        %s473 = sand.u32 %s32, 1
        %s474 = scalar_lea.sflag [#allocation13], %s473
        %s475 = sand.u32 %s176, 1
        %s476 = smul.addr %s475, 8
        %s477 = scalar_lea.vmem [#allocation14], %s476
        %p478 = pneg %p189
        %p479 = pneg %p186
        %s480 = sand.u32 %s206, 1
        %s481 = scalar_lea.sflag [#allocation16], %s480
        %s482 = sand.u32 %s206, 1
        %s483 = smul.addr %s482, 8
        %s484 = scalar_lea.vmem [#allocation15], %s483
        %p485 = pneg %p219
        %p486 = pneg %p216
        %p487 = pneg %p245
        %p488 = pneg %p242
        %s489 = sand.u32 %s232, 1
        %s490 = scalar_lea.sflag [#allocation8], %s489
        %s491 = sand.u32 %s232, 1
        %s492 = smul.addr %s491, 8
        %s493 = scalar_lea.vmem [#allocation17], %s492
        %s494 = smul.u32 %s36, 2
        %s495 = sadd.s32 %s494, %s37
        %s496 = smul.u32 %s36, 2
        %s497 = sadd.s32 %s496, %s37
        %s498 = smul.u32 %s36, 2
        %s499 = sadd.s32 %s498, %s37
        %s500 = smul.u32 %s36, 2
        %s501 = sadd.s32 %s500, %s37
        %s502 = smul.u32 %s36, 2
        %s503 = sadd.s32 %s502, %s37
        %s504 = smul.u32 %s36, 2
        %s505 = sadd.s32 %s504, %s37
        %p506 = scmp.eq.s32.totalorder %s37, 0
        // Predicated region
        $region69: #{tpu_custom_call.1} parent=43 // pred_check
          %p507 = pneg %p506
        $region70: #{tpu_custom_call.1} parent=43 // pred_check_branch
          %509 = sbr.rel (%p507) target = $region72
        $region71: #{tpu_custom_call.1} parent=43 // pred_region
          %510 = vst [vmem:[#allocation2] sm:$0xff] 0.0
          %511 = vst [vmem:[#allocation3] sm:$0xff] 0.0
          %512 = vst [vmem:[#allocation4] sm:$0xff] 0.0
          %513 = vst [vmem:[#allocation5] sm:$0xff] 0.0
        $region72: #{tpu_custom_call.1} parent=43 // pred_fallthru
          _
        %v514 = vld [vmem:[#allocation2] sm:$0xff]
        %v515 = vld [vmem:[%s395] sm:$0xff]
        %v516 = vlog2.pop %v515
        %v517 = vmul.f32 %v516, 0.6931472
        %v518 = vadd.f32 %v517, 0.0
        %v519 = vadd.f32 %v514, %v518
        %520 = vst [vmem:[#allocation2] sm:$0xff] %v519
        %v521 = vld [vmem:[#allocation3] sm:$0xff]
        %v522 = vld [vmem:[%s404] sm:$0xff]
        %v523 = vlog2.pop %v522
        %v524 = vmul.f32 %v523, 0.6931472
        %v525 = vadd.f32 %v524, 0.0
        %v526 = vadd.f32 %v521, %v525
        %527 = vst [vmem:[#allocation3] sm:$0xff] %v526
        %v528 = vld [vmem:[%s413] sm:$0xff]
        %v529 = vld [vmem:[%s422] sm:$0xff]
        %v530 = vsub.f32 %v528, %v529
        %v531 = vld [vmem:[#allocation4] sm:$0xff]
        %v532 = vmul.f32 %v530, %v530
        %v533 = vadd.f32 %v532, 0.0
        %v534 = vadd.f32 %v531, %v533
        %535 = vst [vmem:[#allocation4] sm:$0xff] %v534
        %v536 = vld [vmem:[#allocation5] sm:$0xff]
        %v537 = vld [vmem:[%s431] sm:$0xff]
        %v538 = vld [vmem:[%s440] sm:$0xff]
        %v539 = vsub.f32 %v537, %v538
        %v540 = vand.u32 2147483647, %v539
        %v541 = vadd.f32 %v540, 0.0
        %v542 = vadd.f32 %v536, %v541
        %543 = vst [vmem:[#allocation5] sm:$0xff] %v542
        %p544 = scmp.eq.s32.totalorder %s37, 1
        // Predicated region
        $region73: #{tpu_custom_call.1} parent=43 // pred_check
          %p545 = pneg %p544
        $region74: #{tpu_custom_call.1} parent=43 // pred_check_branch
          %547 = sbr.rel (%p545) target = $region76
        $region75: #{tpu_custom_call.1} parent=43 // pred_region
          %v548 = vld [vmem:[#allocation2] sm:$0xff]
          %v549 = vrot.slane %v548, 4
          %v550 = vadd.f32 %v548, %v549
          %v551 = vrot.slane %v550, 2
          %v552 = vadd.f32 %v550, %v551
          %v553 = vrot.slane %v552, 1
          %v554 = vadd.f32 %v552, %v553
          %555 = vadd.xlane.f32.xlu0 %v554
          %v556 = vpop.xlane.xlu0 %555
          %v557 = vmul.f32 %v556, -0.0028177637
          %v558 = vld [vmem:[#allocation3] sm:$0xff]
          %v559 = vrot.slane %v558, 4
          %v560 = vadd.f32 %v558, %v559
          %v561 = vrot.slane %v560, 2
          %v562 = vadd.f32 %v560, %v561
          %v563 = vrot.slane %v562, 1
          %v564 = vadd.f32 %v562, %v563
          %565 = vadd.xlane.f32.xlu0 %v564
          %v566 = vpop.xlane.xlu0 %565
          %v567 = vmul.f32 %v566, -0.0028177637
          %v568 = vadd.f32 %v557, %v567
          %v569 = vld [vmem:[#allocation4] sm:$0xff]
          %v570 = vrot.slane %v569, 4
          %v571 = vadd.f32 %v569, %v570
          %v572 = vrot.slane %v571, 2
          %v573 = vadd.f32 %v571, %v572
          %v574 = vrot.slane %v573, 1
          %v575 = vadd.f32 %v573, %v574
          %576 = vadd.xlane.f32.xlu0 %v575
          %v577 = vpop.xlane.xlu0 %576
          %v578 = vmul.f32 %v577, 42.333984
          %v579 = vld [vmem:[#allocation5] sm:$0xff]
          %v580 = vrot.slane %v579, 4
          %v581 = vadd.f32 %v579, %v580
          %v582 = vrot.slane %v581, 2
          %v583 = vadd.f32 %v581, %v582
          %v584 = vrot.slane %v583, 1
          %v585 = vadd.f32 %v583, %v584
          %586 = vadd.xlane.f32.xlu0 %v585
          %v587 = vpop.xlane.xlu0 %586
          %v588 = vmul.f32 %v587, 0.001953125
          %v589 = vmul.f32 %v578, 0.01
          %v590 = vadd.f32 %v589, %v568
          %v591 = vadd.f32 %v590, %v588
          %v592 = vlaneseq
          %v593 = vand.u32 %v592, 127
          %vm594 = vcmp.eq.s32.totalorder %v593, 0
          %v595 = vsel %vm594, %v568, 0.0
          %vm596 = vcmp.eq.s32.totalorder %v593, 1
          %v597 = vsel %vm596, %v557, 0.0
          %v598 = vadd.f32 %v595, %v597
          %vm599 = vcmp.eq.s32.totalorder %v593, 2
          %v600 = vsel %vm599, %v567, 0.0
          %v601 = vadd.f32 %v598, %v600
          %vm602 = vcmp.eq.s32.totalorder %v593, 3
          %v603 = vsel %vm602, %v578, 0.0
          %v604 = vadd.f32 %v601, %v603
          %vm605 = vcmp.eq.s32.totalorder %v593, 4
          %v606 = vsel %vm605, %v588, 0.0
          %v607 = vadd.f32 %v604, %v606
          %vm608 = vcmp.eq.s32.totalorder %v593, 5
          %v609 = vsel %vm608, %v591, 0.0
          %v610 = vadd.f32 %v607, %v609
          %611 = vst [vmem:[%s493] sm:$0xff] %v610
        $region76: #{tpu_custom_call.1} parent=43 // pred_fallthru
          _
        %s612 = sand.u32 %s232, 1
        %s613 = scalar_lea.sflag [#allocation8], %s612
        %s614 = sand.u32 %s232, 1
        %s615 = smul.addr %s614, 8
        %s616 = scalar_lea.vmem [#allocation17], %s615
        // Predicated region
        $region77: #{tpu_custom_call.1} parent=43 // pred_check
          %p617 = pneg %p242
        $region78: #{tpu_custom_call.1} parent=43 // pred_check_branch
          %619 = sbr.rel (%p617) target = $region80
        $region79: #{tpu_custom_call.1} parent=43 // pred_region
          %s621 = ssub.s32 128, 128
          %622 = vsyncadd %s613, %s621
          %s623 = smul.addr %s36, 128
          %s624 = scalar_lea.hbm %s6, %s623
          %s626 = sshll.u32 %s616, 4
          %s627 = int_to_ptr.vmem [resolvable:$true] %s626
          %629 = dma.vmem_to_hbm [thread:$0]  %s627, 128, %s624, %s613
        $region80: #{tpu_custom_call.1} parent=43 // pred_fallthru
          _
      $region44: #{tpu_custom_call.1} parent=5 // pred_fallthru
        _
      %p630 = scmp.le.s32.totalorder 2, %s27
      // Predicated region
      $region81: #{tpu_custom_call.1} parent=5 // pred_check
        %p631 = pneg %p630
      $region82: #{tpu_custom_call.1} parent=5 // pred_check_branch
        %633 = sbr.rel (%p631) target = $region84
      $region83: #{tpu_custom_call.1} parent=5 // pred_region
        %s634 = ssub.s32 %s27, 2
        // Predicated region
        $region85: #{tpu_custom_call.1} parent=83 // pred_check
          %p635 = pneg %p248
        $region86: #{tpu_custom_call.1} parent=83 // pred_check_branch
          %637 = sbr.rel (%p635) target = $region88
        $region87: #{tpu_custom_call.1} parent=83 // pred_region
          %s638 = sand.u32 %s233, 1
          %s639 = scalar_lea.sflag [#allocation8], %s638
          %s640 = sand.u32 %s233, 1
          %s641 = smul.addr %s640, 8
          %s642 = scalar_lea.vmem [#allocation17], %s641
          %643 = dma.done %s639, 128
        $region88: #{tpu_custom_call.1} parent=83 // pred_fallthru
          _
      $region84: #{tpu_custom_call.1} parent=5 // pred_fallthru
        _
    $region6: #{tpu_custom_call.1} parent=1 // loop_footer
      %s31 = sadd.s32 1, %s27
    $region7: #{tpu_custom_call.1} parent=1 // loop_footer_branch
      %26 = sbr.rel target = $region3
    $region8: #{tpu_custom_call.1} parent=1 // loop_exit
      _
    %644 = vsyncpa [#allocation7], 1
    %s645 = scalar_lea.sflag [#allocation7], 1
    %646 = vsyncpa %s645, 1
    %647 = vsyncpa [#allocation10], 1
    %s648 = scalar_lea.sflag [#allocation10], 1
    %649 = vsyncpa %s648, 1
    %650 = vsyncpa [#allocation13], 1
    %s651 = scalar_lea.sflag [#allocation13], 1
    %652 = vsyncpa %s651, 1
    %653 = vsyncpa [#allocation16], 1
    %s654 = scalar_lea.sflag [#allocation16], 1
    %655 = vsyncpa %s654, 1
    %656 = vsyncpa [#allocation8], 1
    %s657 = scalar_lea.sflag [#allocation8], 1
    %658 = vsyncpa %s657, 1

</llo_original>
